<compile_context>
chip_gen: v5e
topology: v5e:2x2
jax: 0.10.0
libtpu: 0.0.40
codegen_flags: <defaults>
</compile_context>

<pallas_src>
import jax
import jax.numpy as jnp
from jax.experimental import pallas as pl
from jax.experimental.pallas import tpu as pltpu


def _transpose2d_kernel(x_ref, o_ref):
    # x_ref: (tile_t, tile_bd) VMEM tile of the (T, B*D) view of the input.
    # o_ref: (tile_bd, tile_t) VMEM tile of the (B*D, T) view of the output.
    # Minor-two-dims swap lowers directly to vxpose on the XLU.
    o_ref[...] = x_ref[...].T


def _vmem_capacity_bytes() -> int:
    """Physical VMEM of the current generation; conservative fallback (v7x)."""
    try:
        info = pltpu.get_tpu_info()
        cap = getattr(info, "vmem_capacity_bytes", None)
        if cap:
            return int(cap)
    except Exception:
        pass
    return 64 << 20


def _pick_tile(dim: int, target: int) -> int:
    """Pick a layout-legal tile for one axis.

    dim <= target  -> full extent (always legal, fits the budget).
    dim >  target  -> a 128-multiple tile: prefer an exact divisor in
                      [target/2, target] (no edge masking), else `target`
                      with a cdiv grid and masked edge blocks.
    """
    if dim <= target:
        return dim
    t = target
    floor = max(128, target // 2)
    while t >= floor:
        if dim % t == 0:
            return t
        t -= 128
    return target


def _shrink_tile(tile: int) -> int:
    """Halve a tile, keeping it a 128-multiple (>= 128)."""
    if tile <= 128:
        return tile
    return max(128, ((tile // 2) // 128) * 128)


def rotate3d(x: jax.Array,
             tile_t: int | None = None,
             tile_bd: int | None = None) -> jax.Array:
    """Pallas implementation of Rotate3D: (T, B, D) -> (B, D, T)."""
    T, B, D = x.shape
    BD = B * D
    itemsize = jnp.dtype(x.dtype).itemsize

    # Free reshape on the contiguous layout: no data movement.
    x2 = x.reshape(T, BD)

    # ---- generation-aware per-block VMEM budget --------------------------
    vmem_cap = _vmem_capacity_bytes()
    # 2 double-buffered blocks (in) + 2 (out) must fit with headroom:
    # budget one block at ~capacity/8 (8 MiB on 64 MiB parts, 16 MiB on 128 MiB).
    per_block_bytes = max(vmem_cap // 8, 2 << 20)

    # Tile targets: prefer growing tile_t (output lane dim / HBM contiguity).
    target_t, target_bd = 2048, 2048
    while target_t * target_bd * itemsize > per_block_bytes and target_bd > 128:
        target_bd //= 2
    while target_t * target_bd * itemsize > per_block_bytes and target_t > 128:
        target_t //= 2

    auto_t = tile_t is None
    auto_bd = tile_bd is None
    tile_t = _pick_tile(T, target_t) if auto_t else min(int(tile_t), T)
    tile_bd = _pick_tile(BD, target_bd) if auto_bd else min(int(tile_bd), BD)

    # Clamp tiles (not the VMEM limit) to the budget so double-buffering
    # survives even when full-extent fallbacks would otherwise blow 64 MiB.
    if auto_t or auto_bd:
        while tile_t * tile_bd * itemsize > per_block_bytes:
            if auto_bd and tile_bd > 128:
                tile_bd = _shrink_tile(tile_bd)
            elif auto_t and tile_t > 128:
                tile_t = _shrink_tile(tile_t)
            else:
                break

    # Layout legality (minor dims must be 128-multiples or the full extent;
    # 128-multiples also satisfy the sublane-of-8 rule for second-minor dims).
    assert tile_t == T or tile_t % 128 == 0, \
        "tile_t must be a multiple of 128 or the full T extent"
    assert tile_bd == BD or tile_bd % 128 == 0, \
        "tile_bd must be a multiple of 128 or the full B*D extent"

    # ---- grid: larger-tile-count axis outermost (v7x megacore) ------------
    grid_t = pl.cdiv(T, tile_t)
    grid_bd = pl.cdiv(BD, tile_bd)

    if grid_bd >= grid_t:
        grid = (grid_bd, grid_t)
        in_index = lambda j, i: (i, j)    # noqa: E731
        out_index = lambda j, i: (j, i)   # noqa: E731
    else:
        grid = (grid_t, grid_bd)
        in_index = lambda i, j: (i, j)    # noqa: E731
        out_index = lambda i, j: (j, i)   # noqa: E731

    # ---- VMEM limit: derived from need + headroom, capped by capacity -----
    block_bytes = tile_t * tile_bd * itemsize
    vmem_need = 4 * block_bytes  # double-buffered input + double-buffered output
    vmem_limit = min(vmem_need + (8 << 20), vmem_cap - (8 << 20))
    vmem_limit = int(min(max(vmem_limit, 16 << 20), vmem_cap))

    out2 = pl.pallas_call(
        _transpose2d_kernel,
        out_shape=jax.ShapeDtypeStruct((BD, T), x.dtype),
        grid_spec=pltpu.PrefetchScalarGridSpec(
            num_scalar_prefetch=0,
            grid=grid,
            in_specs=[pl.BlockSpec((tile_t, tile_bd), in_index)],
            out_specs=pl.BlockSpec((tile_bd, tile_t), out_index),
        ),
        compiler_params=pltpu.CompilerParams(
            dimension_semantics=("parallel", "parallel"),
            vmem_limit_bytes=vmem_limit,
        ),
        cost_estimate=pl.CostEstimate(
            flops=0,
            transcendentals=0,
            bytes_accessed=2 * T * BD * itemsize,
        ),
    )(x2)

    # Free reshape back to the (B, D, T) view.
    return out2.reshape(B, D, T)


if __name__ == "__main__":
    key = jax.random.PRNGKey(0)

    # 1) Small shape consistent with the module's (T, B, D) convention.
    T, B, D = 8, 2, 32
    x = jax.random.normal(key, (T, B, D), dtype=jnp.float32)
    out = jax.block_until_ready(rotate3d(x))
    ref = jnp.transpose(x, (1, 2, 0))
    assert out.shape == (B, D, T), out.shape
    assert out.dtype == x.dtype
    assert jnp.array_equal(out, ref), "Pallas Rotate3D mismatch (small case)"

    # 2) Modest 128-aligned case (single big block path).
    T2, B2, D2 = 1024, 2, 128
    x2 = jax.random.normal(jax.random.PRNGKey(0), (T2, B2, D2), dtype=jnp.float32)
    out2 = jax.block_until_ready(rotate3d(x2))
    ref2 = jnp.transpose(x2, (1, 2, 0))
    assert out2.shape == (B2, D2, T2)
    assert jnp.array_equal(out2, ref2), "Pallas Rotate3D mismatch (aligned case)"

    # 3) Non-128-multiple dims with explicit small tiles: exercises the
    #    cdiv grid + masked edge blocks (robustness path from the review).
    T3, B3, D3 = 300, 3, 70
    x3 = jax.random.normal(jax.random.PRNGKey(0), (T3, B3, D3), dtype=jnp.float32)
    out3 = jax.block_until_ready(rotate3d(x3, tile_t=128, tile_bd=128))
    ref3 = jnp.transpose(x3, (1, 2, 0))
    assert out3.shape == (B3, D3, T3)
    assert jnp.array_equal(out3, ref3), "Pallas Rotate3D mismatch (edge-masked case)"

    # 4) bf16 path (packed-dtype transpose).
    T4, B4, D4 = 256, 2, 64
    x4 = jax.random.normal(jax.random.PRNGKey(0), (T4, B4, D4), dtype=jnp.bfloat16)
    out4 = jax.block_until_ready(rotate3d(x4))
    ref4 = jnp.transpose(x4, (1, 2, 0))
    assert out4.shape == (B4, D4, T4)
    assert out4.dtype == jnp.bfloat16
    assert jnp.array_equal(out4, ref4), "Pallas Rotate3D mismatch (bf16 case)"

    print("KERNEL_OK")
</pallas_src>

<mosaic_0001>
module attributes {stable_mosaic.version = 11 : i64} {
  func.func @_transpose2d_kernel(%arg0: i32, %arg1: i32, %arg2: memref<8x64xf32, #tpu.memory_space<vmem>>, %arg3: memref<64x8xf32, #tpu.memory_space<vmem>>) attributes {dimension_semantics = [#tpu.dimension_semantics<parallel>, #tpu.dimension_semantics<parallel>], iteration_bounds = array<i64: 1, 1>, scalar_prefetch = 0 : i64, scratch_operands = 0 : i64, tpu.core_type = #tpu.core_type<tc>, window_params = [{transform_indices = @transform_0, window_bounds = array<i64: 8, 64>}, {transform_indices = @transform_1, window_bounds = array<i64: 64, 8>}]} {
    %c0 = arith.constant 0 : index
    %c0_0 = arith.constant 0 : index
    %0 = vector.load %arg2[%c0, %c0_0] : memref<8x64xf32, #tpu.memory_space<vmem>>, vector<8x64xf32>
    %1 = tpu.transpose %0, [1, 0] : vector<8x64xf32> -> vector<64x8xf32>
    %c0_1 = arith.constant 0 : index
    %c0_2 = arith.constant 0 : index
    %2 = vector.load %arg3[%c0_1, %c0_2] : memref<64x8xf32, #tpu.memory_space<vmem>>, vector<64x8xf32>
    tpu.vector_store %arg3[%c0_1, %c0_2], %1 {strides = array<i32>} : memref<64x8xf32, #tpu.memory_space<vmem>>, vector<64x8xf32>,
    return
  }
  func.func @transform_0(%arg0: i32, %arg1: i32) -> (i32, i32) {
    %c0_i32 = arith.constant 0 : i32
    return %arg1, %arg0 : i32, i32
  }
  func.func @transform_1(%arg0: i32, %arg1: i32) -> (i32, i32) {
    %c0_i32 = arith.constant 0 : i32
    return %arg0, %arg1 : i32, i32
  }
}

</mosaic_0001>

<llo_original>
// kernel: tpu_custom_call.1
$region0: #{tpu_custom_call.1}
  #allocation0 [shape = 'u32[]', space=smem, size = 0x4, offset = 0x4, fixed_abs, tag = 'smem constant byte address 0x4 - core index']
  #allocation1 [shape = 'u32[72,128]{1,0:T(1,128)}', space=vmem, size = 0x9000, scoped, tag = 'internal scratch']
  %s0 = inlined_call_operand.hbm [shape: f32[8,64], index: 0, kind: input, shape index: {}]
  %s1 = inlined_call_operand.vmem [shape: f32[64,8], index: 1, kind: output, shape index: {}]
  %s2 = sld [smem:[#allocation0]]
  $region18: #{tpu_custom_call.1} parent=0
    _
  %s4 = ssub.s32 1, %s2
  %s5 = scalar_select 0, %s4, %s2
  $region1: #{tpu_custom_call.1} parent=0
    #allocation2 [shape = 'u8[4096]{0}', space=vmem, size = 0x1000, scoped, tag = 'input window, operand 0, single buffered']
    #allocation3 [shape = 's32[1]{0}', space=sflag, size = 0x4, scoped, tag = 'scoped memory for tpu_custom_call.1']
    %6 = vsyncpa [#allocation3], 0
    // Predicated region
    $region2: #{tpu_custom_call.1} parent=1 // pred_check
      _
    $region3: #{tpu_custom_call.1} parent=1 // pred_check_branch
      %8 = sbr.rel (0) target = $region5
    $region4: #{tpu_custom_call.1} parent=1 // pred_region
      %10 = vsyncadd [#allocation3], 0
      %s12 = sshll.u32 %s0, 4
      %s13 = int_to_ptr.hbm [resolvable:$true] %s12
      %s14 = sshll.u32 [#allocation2], 4
      %s15 = int_to_ptr.vmem [resolvable:$true] %s14
      %17 = dma.hbm_to_vmem [thread:$0]  %s13, 128, %s15, [#allocation3]
    $region5: #{tpu_custom_call.1} parent=1 // pred_fallthru
      _
    // Predicated region
    $region6: #{tpu_custom_call.1} parent=1 // pred_check
      _
    $region7: #{tpu_custom_call.1} parent=1 // pred_check_branch
      %19 = sbr.rel (0) target = $region9
    $region8: #{tpu_custom_call.1} parent=1 // pred_region
      %21 = dma.done [#allocation3], 128
    $region9: #{tpu_custom_call.1} parent=1 // pred_fallthru
      _
    %v22 = vld [vmem:[#allocation2] sm:$0xff]
    %23 = vxpose.xlu0.b32.start [1/16] %v22, 128
    %24 = vxpose.xlu0.b32.cont [2/16] 0.0, 128
    %25 = vxpose.xlu0.b32.cont [3/16] 0.0, 128
    %26 = vxpose.xlu0.b32.cont [4/16] 0.0, 128
    %27 = vxpose.xlu0.b32.cont [5/16] 0.0, 128
    %28 = vxpose.xlu0.b32.cont [6/16] 0.0, 128
    %29 = vxpose.xlu0.b32.cont [7/16] 0.0, 128
    %30 = vxpose.xlu0.b32.cont [8/16] 0.0, 128
    %31 = vxpose.xlu0.b32.cont [9/16] 0.0, 128
    %32 = vxpose.xlu0.b32.cont [10/16] 0.0, 128
    %33 = vxpose.xlu0.b32.cont [11/16] 0.0, 128
    %34 = vxpose.xlu0.b32.cont [12/16] 0.0, 128
    %35 = vxpose.xlu0.b32.cont [13/16] 0.0, 128
    %36 = vxpose.xlu0.b32.cont [14/16] 0.0, 128
    %37 = vxpose.xlu0.b32.cont [15/16] 0.0, 128
    %38 = vxpose.xlu0.b32.end [16/16] 0.0, 128
    %v39 = vpop.trf.xlu0
    %v40 = vpop.trf.xlu0
    %v41 = vpop.trf.xlu0
    %v42 = vpop.trf.xlu0
    %v43 = vpop.trf.xlu0
    %v44 = vpop.trf.xlu0
    %v45 = vpop.trf.xlu0
    %v46 = vpop.trf.xlu0
    %v47 = vpop.trf.xlu0
    %v48 = vpop.trf.xlu0
    %v49 = vpop.trf.xlu0
    %v50 = vpop.trf.xlu0
    %v51 = vpop.trf.xlu0
    %v52 = vpop.trf.xlu0
    %v53 = vpop.trf.xlu0
    %v54 = vpop.trf.xlu0
    %vm55 = vcmask 64512
    %56 = vst.msk [vmem:[%s1] sm:$0xff] %vm55, %v39
    %57 = vst.msk [vmem:[%s1 + $0x8] sm:$0xff] %vm55, %v40
    %58 = vst.msk [vmem:[%s1 + $0x10] sm:$0xff] %vm55, %v41
    %59 = vst.msk [vmem:[%s1 + $0x18] sm:$0xff] %vm55, %v42
    %60 = vst.msk [vmem:[%s1 + $0x20] sm:$0xff] %vm55, %v43
    %61 = vst.msk [vmem:[%s1 + $0x28] sm:$0xff] %vm55, %v44
    %62 = vst.msk [vmem:[%s1 + $0x30] sm:$0xff] %vm55, %v45
    %63 = vst.msk [vmem:[%s1 + $0x38] sm:$0xff] %vm55, %v46
    // Predicated region
    $region10: #{tpu_custom_call.1} parent=1 // pred_check
      _
    $region11: #{tpu_custom_call.1} parent=1 // pred_check_branch
      %65 = sbr.rel (0) target = $region13
    $region12: #{tpu_custom_call.1} parent=1 // pred_region
      _
    $region13: #{tpu_custom_call.1} parent=1 // pred_fallthru
      _
    // Predicated region
    $region14: #{tpu_custom_call.1} parent=1 // pred_check
      _
    $region15: #{tpu_custom_call.1} parent=1 // pred_check_branch
      %67 = sbr.rel (0) target = $region17
    $region16: #{tpu_custom_call.1} parent=1 // pred_region
      _
    $region17: #{tpu_custom_call.1} parent=1 // pred_fallthru
      _
    %68 = vsyncpa [#allocation3], 1

</llo_original>
